<compile_context>
chip_gen: v5e
topology: v5e:2x2
jax: 0.10.0
libtpu: 0.0.40
codegen_flags: <defaults>
</compile_context>

<pallas_src>
import jax
import jax.numpy as jnp
from jax import lax
from jax.experimental import pallas as pl
from jax.experimental.pallas import tpu as pltpu


NUM_SLOTS = 6  # players per example (fixed by the module: fc1 in_features = 6 * E)


def _round_up(x, m):
    return (x + m - 1) // m * m


def score_kernel(ids_ref, w1f_ref, b1_ref, w2_ref, b2_ref, out_ref):
    """One batch tile: fused (one-hot embedding gather -> fc1 -> relu -> fc2).

    ids_ref : (TILE_B, 6)      int32   player ids for this batch tile
    w1f_ref : (6, P, Hpad)     bf16    per-slot folded (emb_table @ fc1) weights
    b1_ref  : (1, Hpad)        f32
    w2_ref  : (Hpad, Opad)     bf16
    b2_ref  : (1, Opad)        f32
    out_ref : (TILE_B, Opad)   f32
    """
    tile_b = ids_ref.shape[0]
    num_players = w1f_ref.shape[1]
    hpad = w1f_ref.shape[2]

    ids = ids_ref[...]                                           # (TILE_B, 6) int32
    lane = lax.broadcasted_iota(jnp.int32, (tile_b, num_players), 1)

    acc = jnp.zeros((tile_b, hpad), jnp.float32)
    for j in range(NUM_SLOTS):                                    # static unroll: 6 MXU passes
        col = ids[:, j:j + 1]                                     # (TILE_B, 1)
        one_hot = jnp.where(col == lane, 1.0, 0.0).astype(jnp.bfloat16)   # (TILE_B, P)
        acc = acc + jnp.dot(one_hot, w1f_ref[j],
                            preferred_element_type=jnp.float32)

    h = jnp.maximum(acc + b1_ref[...], 0.0)                       # fc1 bias + relu (f32)
    out = jnp.dot(h.astype(jnp.bfloat16), w2_ref[...],
                  preferred_element_type=jnp.float32) + b2_ref[...]
    out_ref[...] = out.astype(out_ref.dtype)


def score_predictor_forward(player_ids, emb_table, w1, b1, w2, b2):
    """Equivalent of ScorePredictor.forward(player_ids).

    player_ids : (B, 6) int32
    emb_table  : (P, E) f32                      nn.Embedding weight
    w1 : (6*E, H) f32, b1 : (1, H) f32           fc1 (transposed vs nn.Linear)
    w2 : (H, O)  f32,  b2 : (1, O) f32           fc2 (transposed vs nn.Linear)
    returns (B, O) f32
    """
    B = player_ids.shape[0]
    P, E = emb_table.shape
    H = w1.shape[1]
    O = w2.shape[1]

    # Lane-dense padded widths (multiples of 128 lanes).
    Hp = _round_up(H, 128)
    Op = _round_up(O, 128)

    # Fold the embedding table into fc1 (parameter-only precompute):
    #   x @ W1 = sum_j onehot(ids[:, j]) @ (emb_table @ W1[j*E:(j+1)*E, :])
    w1_slots = w1.reshape(NUM_SLOTS, E, H)
    w1_fold = jnp.einsum("pe,jeh->jph", emb_table, w1_slots)              # (6, P, H) f32
    w1_fold = jnp.pad(w1_fold, ((0, 0), (0, 0), (0, Hp - H))).astype(jnp.bfloat16)
    b1_p = jnp.pad(b1.reshape(1, H).astype(jnp.float32), ((0, 0), (0, Hp - H)))
    w2_p = jnp.pad(w2, ((0, Hp - H), (0, Op - O))).astype(jnp.bfloat16)
    b2_p = jnp.pad(b2.reshape(1, O).astype(jnp.float32), ((0, 0), (0, Op - O)))

    # Batch tiling: large double-buffered tiles; per-tile VMEM (ids + padded out,
    # x2 buffers) plus resident weights is well under v7x's 64 MiB.
    TILE_B = 512 if B >= 512 else _round_up(max(B, 1), 8)
    B_pad = _round_up(B, TILE_B)
    ids = jnp.pad(player_ids.astype(jnp.int32), ((0, B_pad - B), (0, 0)))

    grid = (B_pad // TILE_B,)

    cost = pl.CostEstimate(
        flops=2 * B_pad * (NUM_SLOTS * P * Hp + Hp * Op),
        transcendentals=0,
        bytes_accessed=(ids.size * 4 + w1_fold.size * 2 + w2_p.size * 2
                        + b1_p.size * 4 + b2_p.size * 4 + B_pad * Op * 4),
    )

    out_padded = pl.pallas_call(
        score_kernel,
        out_shape=jax.ShapeDtypeStruct((B_pad, Op), jnp.float32),
        grid=grid,
        in_specs=[
            pl.BlockSpec((TILE_B, NUM_SLOTS), lambda i: (i, 0)),     # ids: streamed per tile
            pl.BlockSpec((NUM_SLOTS, P, Hp), lambda i: (0, 0, 0)),   # folded fc1: resident
            pl.BlockSpec((1, Hp), lambda i: (0, 0)),                 # b1: resident
            pl.BlockSpec((Hp, Op), lambda i: (0, 0)),                # fc2: resident
            pl.BlockSpec((1, Op), lambda i: (0, 0)),                 # b2: resident
        ],
        out_specs=pl.BlockSpec((TILE_B, Op), lambda i: (i, 0)),
        compiler_params=pltpu.CompilerParams(
            dimension_semantics=("parallel",),   # shard batch tiles across TCs on v7x
        ),
        cost_estimate=cost,
    )(ids, w1_fold, b1_p, w2_p, b2_p)

    return out_padded[:B, :O]


if __name__ == "__main__":
    # Small, forward-consistent shapes.
    num_players, embedding_dim, hidden_dim, output_dim = 32, 16, 32, 4
    batch = 2

    key = jax.random.PRNGKey(0)
    k_emb, k_w1, k_b1, k_w2, k_b2, k_ids = jax.random.split(key, 6)

    # Deterministic synthetic parameters (shapes per nn.Embedding / nn.Linear).
    emb_table = jax.random.normal(k_emb, (num_players, embedding_dim), jnp.float32)
    w1 = jax.random.normal(k_w1, (embedding_dim * 6, hidden_dim), jnp.float32) * 0.1
    b1 = jax.random.normal(k_b1, (1, hidden_dim), jnp.float32) * 0.1
    w2 = jax.random.normal(k_w2, (hidden_dim, output_dim), jnp.float32) * 0.1
    b2 = jax.random.normal(k_b2, (1, output_dim), jnp.float32) * 0.1

    player_ids = jax.random.randint(k_ids, (batch, 6), 0, num_players, jnp.int32)

    fwd = jax.jit(score_predictor_forward)
    scores = fwd(player_ids, emb_table, w1, b1, w2, b2)
    scores = jax.block_until_ready(scores)

    # Pure-JAX f32 reference (same semantics as the PyTorch forward).
    x_ref = jnp.take(emb_table, player_ids.reshape(-1), axis=0).reshape(batch, -1)
    h_ref = jnp.maximum(x_ref @ w1 + b1, 0.0)
    ref = h_ref @ w2 + b2

    assert scores.shape == (batch, output_dim)
    # bf16 hot path with f32 accumulation -> ~1e-2 relative agreement vs the f32 reference.
    assert jnp.allclose(scores, ref, atol=3e-2, rtol=3e-2)
    print("KERNEL_OK")
</pallas_src>

<mosaic_0001>
module attributes {stable_mosaic.version = 11 : i64} {
  func.func @score_kernel(%arg0: i32, %arg1: memref<8x6xi32, #tpu.memory_space<vmem>>, %arg2: memref<6x32x128xbf16, #tpu.memory_space<vmem>>, %arg3: memref<1x128xf32, #tpu.memory_space<vmem>>, %arg4: memref<128x128xbf16, #tpu.memory_space<vmem>>, %arg5: memref<1x128xf32, #tpu.memory_space<vmem>>, %arg6: memref<8x128xf32, #tpu.memory_space<vmem>>) attributes {dimension_semantics = [#tpu.dimension_semantics<parallel>], iteration_bounds = array<i64: 1>, scalar_prefetch = 0 : i64, scratch_operands = 0 : i64, tpu.core_type = #tpu.core_type<tc>, window_params = [{transform_indices = @transform_0, window_bounds = array<i64: 8, 6>}, {pipeline_mode = #tpu.pipeline_mode<synchronous>, transform_indices = @transform_1, window_bounds = array<i64: 6, 32, 128>}, {pipeline_mode = #tpu.pipeline_mode<synchronous>, transform_indices = @transform_2, window_bounds = array<i64: 1, 128>}, {pipeline_mode = #tpu.pipeline_mode<synchronous>, transform_indices = @transform_3, window_bounds = array<i64: 128, 128>}, {pipeline_mode = #tpu.pipeline_mode<synchronous>, transform_indices = @transform_4, window_bounds = array<i64: 1, 128>}, {transform_indices = @transform_5, window_bounds = array<i64: 8, 128>}]} {
    %c0 = arith.constant 0 : index
    %c0_0 = arith.constant 0 : index
    %0 = vector.load %arg1[%c0, %c0_0] : memref<8x6xi32, #tpu.memory_space<vmem>>, vector<8x6xi32>
    %1 = tpu.iota {dimensions = array<i32: 1>} : vector<8x32xi32>
    %cst = arith.constant 0.000000e+00 : f32
    %2 = vector.broadcast %cst : f32 to vector<8x128xf32>
    %3 = vector.extract_strided_slice %0 {offsets = [0, 0], sizes = [8, 1], strides = [1, 1]} : vector<8x6xi32> to vector<8x1xi32>
    %4 = vector.broadcast %3 : vector<8x1xi32> to vector<8x32xi32>
    %5 = arith.cmpi eq, %4, %1 : vector<8x32xi32>
    %cst_1 = arith.constant 1.000000e+00 : f32
    %cst_2 = arith.constant 0.000000e+00 : f32
    %6 = vector.broadcast %cst_1 : f32 to vector<8x32xf32>
    %7 = vector.broadcast %cst_2 : f32 to vector<8x32xf32>
    %8 = arith.select %5, %6, %7 : vector<8x32xi1>, vector<8x32xf32>
    %9 = arith.truncf %8 : vector<8x32xf32> to vector<8x32xbf16>
    %c0_3 = arith.constant 0 : index
    %c0_4 = arith.constant 0 : index
    %c0_5 = arith.constant 0 : index
    %10 = vector.load %arg2[%c0_3, %c0_4, %c0_5] : memref<6x32x128xbf16, #tpu.memory_space<vmem>>, vector<1x32x128xbf16>
    %11 = vector.shape_cast %10 : vector<1x32x128xbf16> to vector<32x128xbf16>
    %cst_6 = arith.constant dense<0.000000e+00> : vector<8x128xf32>
    %12 = tpu.matmul %9, %11, %cst_6 {dimension_numbers = #tpu.dot_dimension_numbers<[1], [0], [0], [1], [0, 0, 1, 1], [], []>} : vector<8x32xbf16>, vector<32x128xbf16>, vector<8x128xf32> -> vector<8x128xf32>
    %13 = arith.addf %2, %12 : vector<8x128xf32>
    %14 = vector.extract_strided_slice %0 {offsets = [0, 1], sizes = [8, 1], strides = [1, 1]} : vector<8x6xi32> to vector<8x1xi32>
    %15 = vector.broadcast %14 : vector<8x1xi32> to vector<8x32xi32>
    %16 = arith.cmpi eq, %15, %1 : vector<8x32xi32>
    %cst_7 = arith.constant 1.000000e+00 : f32
    %cst_8 = arith.constant 0.000000e+00 : f32
    %17 = vector.broadcast %cst_7 : f32 to vector<8x32xf32>
    %18 = vector.broadcast %cst_8 : f32 to vector<8x32xf32>
    %19 = arith.select %16, %17, %18 : vector<8x32xi1>, vector<8x32xf32>
    %20 = arith.truncf %19 : vector<8x32xf32> to vector<8x32xbf16>
    %c1 = arith.constant 1 : index
    %c0_9 = arith.constant 0 : index
    %c0_10 = arith.constant 0 : index
    %21 = vector.load %arg2[%c1, %c0_9, %c0_10] : memref<6x32x128xbf16, #tpu.memory_space<vmem>>, vector<1x32x128xbf16>
    %22 = vector.shape_cast %21 : vector<1x32x128xbf16> to vector<32x128xbf16>
    %cst_11 = arith.constant dense<0.000000e+00> : vector<8x128xf32>
    %23 = tpu.matmul %20, %22, %cst_11 {dimension_numbers = #tpu.dot_dimension_numbers<[1], [0], [0], [1], [0, 0, 1, 1], [], []>} : vector<8x32xbf16>, vector<32x128xbf16>, vector<8x128xf32> -> vector<8x128xf32>
    %24 = arith.addf %13, %23 : vector<8x128xf32>
    %25 = vector.extract_strided_slice %0 {offsets = [0, 2], sizes = [8, 1], strides = [1, 1]} : vector<8x6xi32> to vector<8x1xi32>
    %26 = vector.broadcast %25 : vector<8x1xi32> to vector<8x32xi32>
    %27 = arith.cmpi eq, %26, %1 : vector<8x32xi32>
    %cst_12 = arith.constant 1.000000e+00 : f32
    %cst_13 = arith.constant 0.000000e+00 : f32
    %28 = vector.broadcast %cst_12 : f32 to vector<8x32xf32>
    %29 = vector.broadcast %cst_13 : f32 to vector<8x32xf32>
    %30 = arith.select %27, %28, %29 : vector<8x32xi1>, vector<8x32xf32>
    %31 = arith.truncf %30 : vector<8x32xf32> to vector<8x32xbf16>
    %c2 = arith.constant 2 : index
    %c0_14 = arith.constant 0 : index
    %c0_15 = arith.constant 0 : index
    %32 = vector.load %arg2[%c2, %c0_14, %c0_15] : memref<6x32x128xbf16, #tpu.memory_space<vmem>>, vector<1x32x128xbf16>
    %33 = vector.shape_cast %32 : vector<1x32x128xbf16> to vector<32x128xbf16>
    %cst_16 = arith.constant dense<0.000000e+00> : vector<8x128xf32>
    %34 = tpu.matmul %31, %33, %cst_16 {dimension_numbers = #tpu.dot_dimension_numbers<[1], [0], [0], [1], [0, 0, 1, 1], [], []>} : vector<8x32xbf16>, vector<32x128xbf16>, vector<8x128xf32> -> vector<8x128xf32>
    %35 = arith.addf %24, %34 : vector<8x128xf32>
    %36 = vector.extract_strided_slice %0 {offsets = [0, 3], sizes = [8, 1], strides = [1, 1]} : vector<8x6xi32> to vector<8x1xi32>
    %37 = vector.broadcast %36 : vector<8x1xi32> to vector<8x32xi32>
    %38 = arith.cmpi eq, %37, %1 : vector<8x32xi32>
    %cst_17 = arith.constant 1.000000e+00 : f32
    %cst_18 = arith.constant 0.000000e+00 : f32
    %39 = vector.broadcast %cst_17 : f32 to vector<8x32xf32>
    %40 = vector.broadcast %cst_18 : f32 to vector<8x32xf32>
    %41 = arith.select %38, %39, %40 : vector<8x32xi1>, vector<8x32xf32>
    %42 = arith.truncf %41 : vector<8x32xf32> to vector<8x32xbf16>
    %c3 = arith.constant 3 : index
    %c0_19 = arith.constant 0 : index
    %c0_20 = arith.constant 0 : index
    %43 = vector.load %arg2[%c3, %c0_19, %c0_20] : memref<6x32x128xbf16, #tpu.memory_space<vmem>>, vector<1x32x128xbf16>
    %44 = vector.shape_cast %43 : vector<1x32x128xbf16> to vector<32x128xbf16>
    %cst_21 = arith.constant dense<0.000000e+00> : vector<8x128xf32>
    %45 = tpu.matmul %42, %44, %cst_21 {dimension_numbers = #tpu.dot_dimension_numbers<[1], [0], [0], [1], [0, 0, 1, 1], [], []>} : vector<8x32xbf16>, vector<32x128xbf16>, vector<8x128xf32> -> vector<8x128xf32>
    %46 = arith.addf %35, %45 : vector<8x128xf32>
    %47 = vector.extract_strided_slice %0 {offsets = [0, 4], sizes = [8, 1], strides = [1, 1]} : vector<8x6xi32> to vector<8x1xi32>
    %48 = vector.broadcast %47 : vector<8x1xi32> to vector<8x32xi32>
    %49 = arith.cmpi eq, %48, %1 : vector<8x32xi32>
    %cst_22 = arith.constant 1.000000e+00 : f32
    %cst_23 = arith.constant 0.000000e+00 : f32
    %50 = vector.broadcast %cst_22 : f32 to vector<8x32xf32>
    %51 = vector.broadcast %cst_23 : f32 to vector<8x32xf32>
    %52 = arith.select %49, %50, %51 : vector<8x32xi1>, vector<8x32xf32>
    %53 = arith.truncf %52 : vector<8x32xf32> to vector<8x32xbf16>
    %c4 = arith.constant 4 : index
    %c0_24 = arith.constant 0 : index
    %c0_25 = arith.constant 0 : index
    %54 = vector.load %arg2[%c4, %c0_24, %c0_25] : memref<6x32x128xbf16, #tpu.memory_space<vmem>>, vector<1x32x128xbf16>
    %55 = vector.shape_cast %54 : vector<1x32x128xbf16> to vector<32x128xbf16>
    %cst_26 = arith.constant dense<0.000000e+00> : vector<8x128xf32>
    %56 = tpu.matmul %53, %55, %cst_26 {dimension_numbers = #tpu.dot_dimension_numbers<[1], [0], [0], [1], [0, 0, 1, 1], [], []>} : vector<8x32xbf16>, vector<32x128xbf16>, vector<8x128xf32> -> vector<8x128xf32>
    %57 = arith.addf %46, %56 : vector<8x128xf32>
    %58 = vector.extract_strided_slice %0 {offsets = [0, 5], sizes = [8, 1], strides = [1, 1]} : vector<8x6xi32> to vector<8x1xi32>
    %59 = vector.broadcast %58 : vector<8x1xi32> to vector<8x32xi32>
    %60 = arith.cmpi eq, %59, %1 : vector<8x32xi32>
    %cst_27 = arith.constant 1.000000e+00 : f32
    %cst_28 = arith.constant 0.000000e+00 : f32
    %61 = vector.broadcast %cst_27 : f32 to vector<8x32xf32>
    %62 = vector.broadcast %cst_28 : f32 to vector<8x32xf32>
    %63 = arith.select %60, %61, %62 : vector<8x32xi1>, vector<8x32xf32>
    %64 = arith.truncf %63 : vector<8x32xf32> to vector<8x32xbf16>
    %c5 = arith.constant 5 : index
    %c0_29 = arith.constant 0 : index
    %c0_30 = arith.constant 0 : index
    %65 = vector.load %arg2[%c5, %c0_29, %c0_30] : memref<6x32x128xbf16, #tpu.memory_space<vmem>>, vector<1x32x128xbf16>
    %66 = vector.shape_cast %65 : vector<1x32x128xbf16> to vector<32x128xbf16>
    %cst_31 = arith.constant dense<0.000000e+00> : vector<8x128xf32>
    %67 = tpu.matmul %64, %66, %cst_31 {dimension_numbers = #tpu.dot_dimension_numbers<[1], [0], [0], [1], [0, 0, 1, 1], [], []>} : vector<8x32xbf16>, vector<32x128xbf16>, vector<8x128xf32> -> vector<8x128xf32>
    %68 = arith.addf %57, %67 : vector<8x128xf32>
    %c0_32 = arith.constant 0 : index
    %c0_33 = arith.constant 0 : index
    %69 = vector.load %arg3[%c0_32, %c0_33] : memref<1x128xf32, #tpu.memory_space<vmem>>, vector<1x128xf32>
    %70 = vector.broadcast %69 : vector<1x128xf32> to vector<8x128xf32>
    %71 = arith.addf %68, %70 : vector<8x128xf32>
    %cst_34 = arith.constant 0.000000e+00 : f32
    %72 = vector.broadcast %cst_34 : f32 to vector<8x128xf32>
    %73 = arith.maximumf %71, %72 : vector<8x128xf32>
    %74 = arith.truncf %73 : vector<8x128xf32> to vector<8x128xbf16>
    %c0_35 = arith.constant 0 : index
    %c0_36 = arith.constant 0 : index
    %75 = vector.load %arg4[%c0_35, %c0_36] : memref<128x128xbf16, #tpu.memory_space<vmem>>, vector<128x128xbf16>
    %cst_37 = arith.constant dense<0.000000e+00> : vector<8x128xf32>
    %76 = tpu.matmul %74, %75, %cst_37 {dimension_numbers = #tpu.dot_dimension_numbers<[1], [0], [0], [1], [0, 0, 1, 1], [], []>} : vector<8x128xbf16>, vector<128x128xbf16>, vector<8x128xf32> -> vector<8x128xf32>
    %c0_38 = arith.constant 0 : index
    %c0_39 = arith.constant 0 : index
    %77 = vector.load %arg5[%c0_38, %c0_39] : memref<1x128xf32, #tpu.memory_space<vmem>>, vector<1x128xf32>
    %78 = vector.broadcast %77 : vector<1x128xf32> to vector<8x128xf32>
    %79 = arith.addf %76, %78 : vector<8x128xf32>
    %c0_40 = arith.constant 0 : index
    %c0_41 = arith.constant 0 : index
    %80 = vector.load %arg6[%c0_40, %c0_41] : memref<8x128xf32, #tpu.memory_space<vmem>>, vector<8x128xf32>
    tpu.vector_store %arg6[%c0_40, %c0_41], %79 {strides = array<i32>} : memref<8x128xf32, #tpu.memory_space<vmem>>, vector<8x128xf32>,
    return
  }
  func.func @transform_0(%arg0: i32) -> (i32, i32) {
    %c0_i32 = arith.constant 0 : i32
    %c0_i32_0 = arith.constant 0 : i32
    return %arg0, %c0_i32 : i32, i32
  }
  func.func @transform_1(%arg0: i32) -> (i32, i32, i32) {
    %c0_i32 = arith.constant 0 : i32
    %c0_i32_0 = arith.constant 0 : i32
    %c0_i32_1 = arith.constant 0 : i32
    %c0_i32_2 = arith.constant 0 : i32
    return %c0_i32, %c0_i32_0, %c0_i32_1 : i32, i32, i32
  }
  func.func @transform_2(%arg0: i32) -> (i32, i32) {
    %c0_i32 = arith.constant 0 : i32
    %c0_i32_0 = arith.constant 0 : i32
    %c0_i32_1 = arith.constant 0 : i32
    return %c0_i32, %c0_i32_0 : i32, i32
  }
  func.func @transform_3(%arg0: i32) -> (i32, i32) {
    %c0_i32 = arith.constant 0 : i32
    %c0_i32_0 = arith.constant 0 : i32
    %c0_i32_1 = arith.constant 0 : i32
    return %c0_i32, %c0_i32_0 : i32, i32
  }
  func.func @transform_4(%arg0: i32) -> (i32, i32) {
    %c0_i32 = arith.constant 0 : i32
    %c0_i32_0 = arith.constant 0 : i32
    %c0_i32_1 = arith.constant 0 : i32
    return %c0_i32, %c0_i32_0 : i32, i32
  }
  func.func @transform_5(%arg0: i32) -> (i32, i32) {
    %c0_i32 = arith.constant 0 : i32
    %c0_i32_0 = arith.constant 0 : i32
    return %arg0, %c0_i32 : i32, i32
  }
}

</mosaic_0001>

<llo_original>
// kernel: score_predictor_forward.1
$region0: #{score_predictor_forward.1}
  #allocation0 [shape = 'u32[]', space=smem, size = 0x4, offset = 0x4, fixed_abs, tag = 'smem constant byte address 0x4 - core index']
  #allocation1 [shape = 'u32[72,128]{1,0:T(1,128)}', space=vmem, size = 0x9000, scoped, tag = 'internal scratch']
  %s0 = inlined_call_operand.vmem [shape: s32[8,6], index: 0, kind: input, shape index: {}]
  %s1 = inlined_call_operand.vmem [shape: bf16[6,32,128], index: 1, kind: input, shape index: {}]
  %s2 = inlined_call_operand.vmem [shape: f32[1,128], index: 2, kind: input, shape index: {}]
  %s3 = inlined_call_operand.vmem [shape: bf16[128,128], index: 3, kind: input, shape index: {}]
  %s4 = inlined_call_operand.vmem [shape: f32[1,128], index: 4, kind: input, shape index: {}]
  %s5 = inlined_call_operand.vmem [shape: f32[8,128], index: 5, kind: output, shape index: {}]
  %s6 = sld [smem:[#allocation0]]
  $region30: #{score_predictor_forward.1} parent=0
    _
  %s8 = ssub.s32 1, %s6
  %s9 = scalar_select 0, %s8, %s6
  // Predicated region
  $region2: #{score_predictor_forward.1} parent=0 // pred_check
    _
  $region3: #{score_predictor_forward.1} parent=0 // pred_check_branch
    %11 = sbr.rel (0) target = $region5
  $region4: #{score_predictor_forward.1} parent=0 // pred_region
    _
  $region5: #{score_predictor_forward.1} parent=0 // pred_fallthru
    _
  // Predicated region
  $region6: #{score_predictor_forward.1} parent=0 // pred_check
    _
  $region7: #{score_predictor_forward.1} parent=0 // pred_check_branch
    %13 = sbr.rel (0) target = $region9
  $region8: #{score_predictor_forward.1} parent=0 // pred_region
    _
  $region9: #{score_predictor_forward.1} parent=0 // pred_fallthru
    _
  // Predicated region
  $region10: #{score_predictor_forward.1} parent=0 // pred_check
    _
  $region11: #{score_predictor_forward.1} parent=0 // pred_check_branch
    %15 = sbr.rel (0) target = $region13
  $region12: #{score_predictor_forward.1} parent=0 // pred_region
    _
  $region13: #{score_predictor_forward.1} parent=0 // pred_fallthru
    _
  // Predicated region
  $region14: #{score_predictor_forward.1} parent=0 // pred_check
    _
  $region15: #{score_predictor_forward.1} parent=0 // pred_check_branch
    %17 = sbr.rel (0) target = $region17
  $region16: #{score_predictor_forward.1} parent=0 // pred_region
    _
  $region17: #{score_predictor_forward.1} parent=0 // pred_fallthru
    _
  // Predicated region
  $region18: #{score_predictor_forward.1} parent=0 // pred_check
    _
  $region19: #{score_predictor_forward.1} parent=0 // pred_check_branch
    %19 = sbr.rel (0) target = $region21
  $region20: #{score_predictor_forward.1} parent=0 // pred_region
    _
  $region21: #{score_predictor_forward.1} parent=0 // pred_fallthru
    _
  %v21 = vld [vmem:[%s0] sm:$0xff]
  %v22 = vlaneseq
  %v23 = vand.u32 %v22, 127
  %24 = vset.pattern.permute.xlu0 0
  %25 = vperm.xlu0 %24, %v21
  %v26 = vpop.permute.xlu0 %25
  %vm27 = vcmp.eq.s32.totalorder %v26, %v23
  %v28 = vsel %vm27, 1.0, 0.0
  %v29 = vpack.c.bf16 %v28, %v28
  %v30 = vld [vmem:[%s1] sm:$0xf]
  %v31 = vld [vmem:[%s1 + $0x4] sm:$0xf]
  %v32 = vld [vmem:[%s1 + $0x8] sm:$0xf]
  %v33 = vld [vmem:[%s1 + $0xc] sm:$0xf]
  %34 = vset.pattern.permute.xlu0 1
  %35 = vperm.xlu0 %34, %v21
  %v36 = vpop.permute.xlu0 %35
  %vm37 = vcmp.eq.s32.totalorder %v36, %v23
  %v38 = vsel %vm37, 1.0, 0.0
  %v39 = vpack.c.bf16 %v38, %v38
  %s40 = scalar_lea.vmem %s1, 16
  %v41 = vld [vmem:[%s40] sm:$0xf]
  %v42 = vld [vmem:[%s40 + $0x4] sm:$0xf]
  %v43 = vld [vmem:[%s40 + $0x8] sm:$0xf]
  %v44 = vld [vmem:[%s40 + $0xc] sm:$0xf]
  %v49 = vunpack.c.l.b16 %v41
  %v50 = vunpack.c.l.b16 %v42
  %v51 = vunpack.c.l.b16 %v43
  %v52 = vunpack.c.l.b16 %v44
  %v53 = vpack.c.b16 %v50, %v49
  %v54 = vpack.c.b16 %v52, %v51
  %vm57 = vcmask 261120
  %v59 = vsel %vm57, %v39, 0
  %61 = vmatpush.bf16.msra.mxu0 0
  %62 = vmatpush.bf16.msra.mxu0 0
  %63 = vmatpush.bf16.msra.mxu0 0
  %64 = vmatpush.bf16.msra.mxu0 0
  %65 = vmatpush.bf16.msra.mxu0 0
  %66 = vmatpush.bf16.msra.mxu0 0
  %67 = vmatpush.bf16.msra.mxu0 %v54
  %68 = vmatpush.bf16.msra.mxu0 %v53
  %69 = vmatmul.bf16.gmra.mxu0 %v59
  %v70 = vpop.f32.mrf.mxu0
  %v71 = vadd.f32 0.0, %v70
  %v72 = vpop.f32.mrf.mxu0
  %73 = vdwg.mxu0
  %v78 = vunpack.c.l.b16 %v30
  %v79 = vunpack.c.l.b16 %v31
  %v80 = vunpack.c.l.b16 %v32
  %v81 = vunpack.c.l.b16 %v33
  %v82 = vpack.c.b16 %v79, %v78
  %v83 = vpack.c.b16 %v81, %v80
  %v87 = vsel %vm57, %v29, 0
  %89 = vmatpush.bf16.msra.mxu0 0
  %90 = vmatpush.bf16.msra.mxu0 0
  %91 = vmatpush.bf16.msra.mxu0 0
  %92 = vmatpush.bf16.msra.mxu0 0
  %93 = vmatpush.bf16.msra.mxu0 0
  %94 = vmatpush.bf16.msra.mxu0 0
  %95 = vmatpush.bf16.msra.mxu0 %v83
  %96 = vmatpush.bf16.msra.mxu0 %v82
  %97 = vmatmul.bf16.gmra.mxu0 %v87
  %v98 = vpop.f32.mrf.mxu0
  %v99 = vadd.f32 %v71, %v98
  %v100 = vpop.f32.mrf.mxu0
  %101 = vdwg.mxu0
  %102 = vset.pattern.permute.xlu0 2
  %103 = vperm.xlu0 %102, %v21
  %v104 = vpop.permute.xlu0 %103
  %vm105 = vcmp.eq.s32.totalorder %v104, %v23
  %v106 = vsel %vm105, 1.0, 0.0
  %v107 = vpack.c.bf16 %v106, %v106
  %s108 = scalar_lea.vmem %s1, 32
  %v109 = vld [vmem:[%s108] sm:$0xf]
  %v110 = vld [vmem:[%s108 + $0x4] sm:$0xf]
  %v111 = vld [vmem:[%s108 + $0x8] sm:$0xf]
  %v112 = vld [vmem:[%s108 + $0xc] sm:$0xf]
  %v117 = vunpack.c.l.b16 %v109
  %v118 = vunpack.c.l.b16 %v110
  %v119 = vunpack.c.l.b16 %v111
  %v120 = vunpack.c.l.b16 %v112
  %v121 = vpack.c.b16 %v118, %v117
  %v122 = vpack.c.b16 %v120, %v119
  %v126 = vsel %vm57, %v107, 0
  %128 = vmatpush.bf16.msra.mxu0 0
  %129 = vmatpush.bf16.msra.mxu0 0
  %130 = vmatpush.bf16.msra.mxu0 0
  %131 = vmatpush.bf16.msra.mxu0 0
  %132 = vmatpush.bf16.msra.mxu0 0
  %133 = vmatpush.bf16.msra.mxu0 0
  %134 = vmatpush.bf16.msra.mxu0 %v122
  %135 = vmatpush.bf16.msra.mxu0 %v121
  %136 = vmatmul.bf16.gmra.mxu0 %v126
  %v137 = vpop.f32.mrf.mxu0
  %v138 = vadd.f32 0.0, %v137
  %v139 = vpop.f32.mrf.mxu0
  %140 = vdwg.mxu0
  %v141 = vadd.f32 %v99, %v138
  %142 = vset.pattern.permute.xlu0 3
  %143 = vperm.xlu0 %142, %v21
  %v144 = vpop.permute.xlu0 %143
  %vm145 = vcmp.eq.s32.totalorder %v144, %v23
  %v146 = vsel %vm145, 1.0, 0.0
  %v147 = vpack.c.bf16 %v146, %v146
  %s148 = scalar_lea.vmem %s1, 48
  %v149 = vld [vmem:[%s148] sm:$0xf]
  %v150 = vld [vmem:[%s148 + $0x4] sm:$0xf]
  %v151 = vld [vmem:[%s148 + $0x8] sm:$0xf]
  %v152 = vld [vmem:[%s148 + $0xc] sm:$0xf]
  %v157 = vunpack.c.l.b16 %v149
  %v158 = vunpack.c.l.b16 %v150
  %v159 = vunpack.c.l.b16 %v151
  %v160 = vunpack.c.l.b16 %v152
  %v161 = vpack.c.b16 %v158, %v157
  %v162 = vpack.c.b16 %v160, %v159
  %v166 = vsel %vm57, %v147, 0
  %168 = vmatpush.bf16.msra.mxu0 0
  %169 = vmatpush.bf16.msra.mxu0 0
  %170 = vmatpush.bf16.msra.mxu0 0
  %171 = vmatpush.bf16.msra.mxu0 0
  %172 = vmatpush.bf16.msra.mxu0 0
  %173 = vmatpush.bf16.msra.mxu0 0
  %174 = vmatpush.bf16.msra.mxu0 %v162
  %175 = vmatpush.bf16.msra.mxu0 %v161
  %176 = vmatmul.bf16.gmra.mxu0 %v166
  %v177 = vpop.f32.mrf.mxu0
  %v178 = vadd.f32 0.0, %v177
  %v179 = vpop.f32.mrf.mxu0
  %180 = vdwg.mxu0
  %v181 = vadd.f32 %v141, %v178
  %182 = vset.pattern.permute.xlu0 4
  %183 = vperm.xlu0 %182, %v21
  %v184 = vpop.permute.xlu0 %183
  %vm185 = vcmp.eq.s32.totalorder %v184, %v23
  %v186 = vsel %vm185, 1.0, 0.0
  %v187 = vpack.c.bf16 %v186, %v186
  %s188 = scalar_lea.vmem %s1, 64
  %v189 = vld [vmem:[%s188] sm:$0xf]
  %v190 = vld [vmem:[%s188 + $0x4] sm:$0xf]
  %v191 = vld [vmem:[%s188 + $0x8] sm:$0xf]
  %v192 = vld [vmem:[%s188 + $0xc] sm:$0xf]
  %v197 = vunpack.c.l.b16 %v189
  %v198 = vunpack.c.l.b16 %v190
  %v199 = vunpack.c.l.b16 %v191
  %v200 = vunpack.c.l.b16 %v192
  %v201 = vpack.c.b16 %v198, %v197
  %v202 = vpack.c.b16 %v200, %v199
  %v206 = vsel %vm57, %v187, 0
  %208 = vmatpush.bf16.msra.mxu0 0
  %209 = vmatpush.bf16.msra.mxu0 0
  %210 = vmatpush.bf16.msra.mxu0 0
  %211 = vmatpush.bf16.msra.mxu0 0
  %212 = vmatpush.bf16.msra.mxu0 0
  %213 = vmatpush.bf16.msra.mxu0 0
  %214 = vmatpush.bf16.msra.mxu0 %v202
  %215 = vmatpush.bf16.msra.mxu0 %v201
  %216 = vmatmul.bf16.gmra.mxu0 %v206
  %v217 = vpop.f32.mrf.mxu0
  %v218 = vadd.f32 0.0, %v217
  %v219 = vpop.f32.mrf.mxu0
  %220 = vdwg.mxu0
  %v221 = vadd.f32 %v181, %v218
  %222 = vset.pattern.permute.xlu0 5
  %223 = vperm.xlu0 %222, %v21
  %v224 = vpop.permute.xlu0 %223
  %vm225 = vcmp.eq.s32.totalorder %v224, %v23
  %v226 = vsel %vm225, 1.0, 0.0
  %v227 = vpack.c.bf16 %v226, %v226
  %s228 = scalar_lea.vmem %s1, 80
  %v229 = vld [vmem:[%s228] sm:$0xf]
  %v230 = vld [vmem:[%s228 + $0x4] sm:$0xf]
  %v231 = vld [vmem:[%s228 + $0x8] sm:$0xf]
  %v232 = vld [vmem:[%s228 + $0xc] sm:$0xf]
  %v237 = vunpack.c.l.b16 %v229
  %v238 = vunpack.c.l.b16 %v230
  %v239 = vunpack.c.l.b16 %v231
  %v240 = vunpack.c.l.b16 %v232
  %v241 = vpack.c.b16 %v238, %v237
  %v242 = vpack.c.b16 %v240, %v239
  %v246 = vsel %vm57, %v227, 0
  %248 = vmatpush.bf16.msra.mxu0 0
  %249 = vmatpush.bf16.msra.mxu0 0
  %250 = vmatpush.bf16.msra.mxu0 0
  %251 = vmatpush.bf16.msra.mxu0 0
  %252 = vmatpush.bf16.msra.mxu0 0
  %253 = vmatpush.bf16.msra.mxu0 0
  %254 = vmatpush.bf16.msra.mxu0 %v242
  %255 = vmatpush.bf16.msra.mxu0 %v241
  %256 = vmatmul.bf16.gmra.mxu0 %v246
  %v257 = vpop.f32.mrf.mxu0
  %v258 = vadd.f32 0.0, %v257
  %v259 = vpop.f32.mrf.mxu0
  %260 = vdwg.mxu0
  %v261 = vadd.f32 %v221, %v258
  %v262 = vld [vmem:[%s2] sm:$0x1]
  %v264 = vperm.slane %v262, 0
  %v266 = vadd.f32 %v261, %v264
  %v267 = vmax.f32 %v266, 0.0
  %v268 = vpack.c.bf16 %v267, %v267
  %v269 = vld [vmem:[%s3] sm:$0xf]
  %v270 = vld [vmem:[%s3 + $0x4] sm:$0xf]
  %v271 = vld [vmem:[%s3 + $0x8] sm:$0xf]
  %v272 = vld [vmem:[%s3 + $0xc] sm:$0xf]
  %v273 = vld [vmem:[%s3 + $0x10] sm:$0xf]
  %v274 = vld [vmem:[%s3 + $0x14] sm:$0xf]
  %v275 = vld [vmem:[%s3 + $0x18] sm:$0xf]
  %v276 = vld [vmem:[%s3 + $0x1c] sm:$0xf]
  %v277 = vld [vmem:[%s3 + $0x20] sm:$0xf]
  %v278 = vld [vmem:[%s3 + $0x24] sm:$0xf]
  %v279 = vld [vmem:[%s3 + $0x28] sm:$0xf]
  %v280 = vld [vmem:[%s3 + $0x2c] sm:$0xf]
  %v281 = vld [vmem:[%s3 + $0x30] sm:$0xf]
  %v282 = vld [vmem:[%s3 + $0x34] sm:$0xf]
  %v283 = vld [vmem:[%s3 + $0x38] sm:$0xf]
  %v284 = vld [vmem:[%s3 + $0x3c] sm:$0xf]
  %v285 = vld [vmem:[%s4] sm:$0x1]
  %v287 = vperm.slane %v285, 0
  %v305 = vunpack.c.l.b16 %v269
  %v306 = vunpack.c.l.b16 %v270
  %v307 = vunpack.c.l.b16 %v271
  %v308 = vunpack.c.l.b16 %v272
  %v309 = vunpack.c.l.b16 %v273
  %v310 = vunpack.c.l.b16 %v274
  %v311 = vunpack.c.l.b16 %v275
  %v312 = vunpack.c.l.b16 %v276
  %v313 = vunpack.c.l.b16 %v277
  %v314 = vunpack.c.l.b16 %v278
  %v315 = vunpack.c.l.b16 %v279
  %v316 = vunpack.c.l.b16 %v280
  %v317 = vunpack.c.l.b16 %v281
  %v318 = vunpack.c.l.b16 %v282
  %v319 = vunpack.c.l.b16 %v283
  %v320 = vunpack.c.l.b16 %v284
  %v321 = vpack.c.b16 %v306, %v305
  %v322 = vpack.c.b16 %v308, %v307
  %v323 = vpack.c.b16 %v310, %v309
  %v324 = vpack.c.b16 %v312, %v311
  %v325 = vpack.c.b16 %v314, %v313
  %v326 = vpack.c.b16 %v316, %v315
  %v327 = vpack.c.b16 %v318, %v317
  %v328 = vpack.c.b16 %v320, %v319
  %337 = vmatpush.bf16.msra.mxu0 %v328
  %338 = vmatpush.bf16.msra.mxu0 %v327
  %339 = vmatpush.bf16.msra.mxu0 %v326
  %340 = vmatpush.bf16.msra.mxu0 %v325
  %341 = vmatpush.bf16.msra.mxu0 %v324
  %342 = vmatpush.bf16.msra.mxu0 %v323
  %343 = vmatpush.bf16.msra.mxu0 %v322
  %344 = vmatpush.bf16.msra.mxu0 %v321
  %345 = vmatmul.bf16.gmra.mxu0 %v268
  %v346 = vpop.f32.mrf.mxu0
  %v347 = vadd.f32 %v287, %v346
  %v348 = vpop.f32.mrf.mxu0
  %349 = vdwg.mxu0
  %350 = vst [vmem:[%s5] sm:$0xff] %v347
  // Predicated region
  $region22: #{score_predictor_forward.1} parent=0 // pred_check
    _
  $region23: #{score_predictor_forward.1} parent=0 // pred_check_branch
    %352 = sbr.rel (0) target = $region25
  $region24: #{score_predictor_forward.1} parent=0 // pred_region
    _
  $region25: #{score_predictor_forward.1} parent=0 // pred_fallthru
    _
  // Predicated region
  $region26: #{score_predictor_forward.1} parent=0 // pred_check
    _
  $region27: #{score_predictor_forward.1} parent=0 // pred_check_branch
    %354 = sbr.rel (0) target = $region29
  $region28: #{score_predictor_forward.1} parent=0 // pred_region
    _
  $region29: #{score_predictor_forward.1} parent=0 // pred_fallthru
    _

</llo_original>
